<compile_context>
chip_gen: v7x
topology: tpu7x:2x2x1
jax: 0.10.0
libtpu: 0.0.40
codegen_flags: <defaults>
</compile_context>

<pallas_src>
import functools

import jax
import jax.numpy as jnp
from jax.experimental import pallas as pl
from jax.experimental.pallas import tpu as pltpu


def _torgb_kernel_noskip(x_ref, w_ref, b_ref, o_ref):
    # x_ref: (tmp, p*in_dim)  w_ref: (p*in_dim, p*dim_rgb)  b_ref: (1, p*dim_rgb)
    # o_ref: (tmp, p*dim_rgb)
    acc = jnp.dot(x_ref[...], w_ref[...], preferred_element_type=jnp.float32)
    acc = acc + b_ref[...].astype(jnp.float32)
    o_ref[...] = acc.astype(o_ref.dtype)


def _torgb_kernel_skip(x_ref, w_ref, b_ref, s_ref, o_ref):
    # Same as above plus skip tile s_ref: (tmp, p*dim_rgb), natural layout.
    acc = jnp.dot(x_ref[...], w_ref[...], preferred_element_type=jnp.float32)
    acc = acc + b_ref[...].astype(jnp.float32) + s_ref[...].astype(jnp.float32)
    o_ref[...] = acc.astype(o_ref.dtype)


def _pick_pack(M, in_dim):
    """Largest power-of-two p dividing M with p*in_dim ~<= 128 lanes."""
    p = max(1, 128 // max(in_dim, 1))
    p = 1 << (p.bit_length() - 1)          # floor to a power of two
    while p > 1 and M % p:
        p //= 2
    return p


@functools.partial(jax.jit, static_argnames=("tm",))
def to_rgb_forward(x, weight, bias, skip=None, *, tm=32768):
    """Pallas implementation of ToRGB.forward.

    x      : (B, N, in_dim)
    weight : (dim_rgb, in_dim)   (PyTorch nn.Linear layout)
    bias   : (dim_rgb,)
    skip   : optional (B, N, dim_rgb)
    tm     : points (original rows) per grid step.
    """
    B, N, in_dim = x.shape
    dim_rgb = weight.shape[0]
    M = B * N
    SUB = 8  # sublane granularity

    # --- packing: p consecutive points -> one lane-dense row (free reshapes) ---
    p = _pick_pack(M, in_dim)
    pK, pR = p * in_dim, p * dim_rgb
    Mp = M // p

    x4 = x.reshape(Mp, pK)                                      # no data movement
    w4 = jnp.kron(jnp.eye(p, dtype=weight.dtype), weight.T)     # (pK, pR), block-diag
    b4 = jnp.tile(bias, p).reshape(1, pR)
    s4 = None if skip is None else skip.reshape(Mp, pR)         # no data movement

    # --- tile selection ---------------------------------------------------------
    tmp = max(SUB, (tm // p) // SUB * SUB)                      # packed rows / step
    tmp_eff = min(tmp, pl.cdiv(Mp, SUB) * SUB)                  # small M: 1 block
    if pl.cdiv(Mp, tmp_eff) == 1 and Mp > 4096:
        # Big single-block problem: keep >=2 grid steps so both v7x TensorCores work.
        tmp_eff = pl.cdiv(pl.cdiv(Mp, 2), SUB) * SUB
    grid = (pl.cdiv(Mp, tmp_eff),)                              # ragged last block OK

    x_spec = pl.BlockSpec((tmp_eff, pK), lambda i: (i, 0))
    w_spec = pl.BlockSpec((pK, pR), lambda i: (0, 0))           # resident
    b_spec = pl.BlockSpec((1, pR), lambda i: (0, 0))            # resident
    o_spec = pl.BlockSpec((tmp_eff, pR), lambda i: (i, 0))
    out_shape = jax.ShapeDtypeStruct((Mp, pR), x.dtype)
    cparams = pltpu.CompilerParams(
        dimension_semantics=("parallel",),
        vmem_limit_bytes=48 * 1024 * 1024,
    )

    if s4 is not None:
        s_spec = pl.BlockSpec((tmp_eff, pR), lambda i: (i, 0))
        out4 = pl.pallas_call(
            _torgb_kernel_skip,
            out_shape=out_shape,
            grid_spec=pltpu.PrefetchScalarGridSpec(
                num_scalar_prefetch=0,
                grid=grid,
                in_specs=[x_spec, w_spec, b_spec, s_spec],
                out_specs=o_spec,
            ),
            compiler_params=cparams,
        )(x4, w4, b4, s4)
    else:
        out4 = pl.pallas_call(
            _torgb_kernel_noskip,
            out_shape=out_shape,
            grid_spec=pltpu.PrefetchScalarGridSpec(
                num_scalar_prefetch=0,
                grid=grid,
                in_specs=[x_spec, w_spec, b_spec],
                out_specs=o_spec,
            ),
            compiler_params=cparams,
        )(x4, w4, b4)

    # Free reshape back to (B, N, dim_rgb) — no transpose, no slice copy.
    return out4.reshape(B, N, dim_rgb)


def init_to_rgb_params(key, in_dim, dim_rgb=3, dtype=jnp.float32):
    """Deterministic init mirroring nn.Linear's uniform(-1/sqrt(in), 1/sqrt(in))."""
    kw, kb = jax.random.split(key)
    bound = 1.0 / jnp.sqrt(jnp.asarray(in_dim, dtype=jnp.float32))
    weight = jax.random.uniform(kw, (dim_rgb, in_dim), dtype, -bound, bound)
    bias = jax.random.uniform(kb, (dim_rgb,), dtype, -bound, bound)
    return weight, bias


if __name__ == "__main__":
    key = jax.random.PRNGKey(0)
    kx, ks, kp, kx2, ks2 = jax.random.split(key, 5)

    in_dim, dim_rgb = 32, 3
    weight, bias = init_to_rgb_params(kp, in_dim, dim_rgb)

    # --- Small shape (single resident block), with and without skip ------------
    B, N = 2, 64                                   # M = 128 points, pack p = 4
    x = jax.random.normal(kx, (B, N, in_dim), dtype=jnp.float32)
    skip = jax.random.normal(ks, (B, N, dim_rgb), dtype=jnp.float32)

    out_skip = to_rgb_forward(x, weight, bias, skip)
    out_noskip = to_rgb_forward(x, weight, bias, None)
    jax.block_until_ready(out_skip)
    jax.block_until_ready(out_noskip)

    ref = jnp.einsum("bni,oi->bno", x, weight) + bias
    assert out_skip.shape == (B, N, dim_rgb)
    assert jnp.allclose(out_noskip, ref, atol=1e-5, rtol=1e-5)
    assert jnp.allclose(out_skip, ref + skip, atol=1e-5, rtol=1e-5)

    # --- Multi-step + ragged last block (M = 1292 points, tm=512 -> 3 steps) ---
    B2, N2 = 2, 646
    x2 = jax.random.normal(kx2, (B2, N2, in_dim), dtype=jnp.float32)
    skip2 = jax.random.normal(ks2, (B2, N2, dim_rgb), dtype=jnp.float32)
    out2 = to_rgb_forward(x2, weight, bias, skip2, tm=512)
    jax.block_until_ready(out2)
    ref2 = jnp.einsum("bni,oi->bno", x2, weight) + bias + skip2
    assert jnp.allclose(out2, ref2, atol=1e-5, rtol=1e-5)

    # --- Odd point count: packing falls back to p=1 (narrow-lane path) ---------
    B3, N3 = 1, 193
    x3 = jax.random.normal(kx, (B3, N3, in_dim), dtype=jnp.float32)
    out3 = to_rgb_forward(x3, weight, bias, None)
    jax.block_until_ready(out3)
    ref3 = jnp.einsum("bni,oi->bno", x3, weight) + bias
    assert jnp.allclose(out3, ref3, atol=1e-5, rtol=1e-5)

    # --- bf16 fast path (halves HBM bytes; f32 MXU accumulation) ---------------
    xb, sb = x.astype(jnp.bfloat16), skip.astype(jnp.bfloat16)
    wb, bb = weight.astype(jnp.bfloat16), bias.astype(jnp.bfloat16)
    outb = to_rgb_forward(xb, wb, bb, sb)
    jax.block_until_ready(outb)
    refb = (jnp.einsum("bni,oi->bno", xb.astype(jnp.float32), wb.astype(jnp.float32))
            + bb.astype(jnp.float32) + sb.astype(jnp.float32))
    assert outb.dtype == jnp.bfloat16
    assert jnp.allclose(outb.astype(jnp.float32), refb, atol=5e-2, rtol=5e-2)

    print("KERNEL_OK")
</pallas_src>

<mosaic_0001>
module attributes {stable_mosaic.version = 11 : i64} {
  func.func @_torgb_kernel_skip(%arg0: i32, %arg1: memref<32x128xf32, #tpu.memory_space<vmem>>, %arg2: memref<128x12xf32, #tpu.memory_space<vmem>>, %arg3: memref<1x12xf32, #tpu.memory_space<vmem>>, %arg4: memref<32x12xf32, #tpu.memory_space<vmem>>, %arg5: memref<32x12xf32, #tpu.memory_space<vmem>>) attributes {dimension_semantics = [#tpu.dimension_semantics<parallel>], iteration_bounds = array<i64: 1>, scalar_prefetch = 0 : i64, scratch_operands = 0 : i64, tpu.core_type = #tpu.core_type<tc>, window_params = [{transform_indices = @transform_0, window_bounds = array<i64: 32, 128>}, {pipeline_mode = #tpu.pipeline_mode<synchronous>, transform_indices = @transform_1, window_bounds = array<i64: 128, 12>}, {pipeline_mode = #tpu.pipeline_mode<synchronous>, transform_indices = @transform_2, window_bounds = array<i64: 1, 12>}, {transform_indices = @transform_3, window_bounds = array<i64: 32, 12>}, {transform_indices = @transform_4, window_bounds = array<i64: 32, 12>}]} {
    %c0 = arith.constant 0 : index
    %c0_0 = arith.constant 0 : index
    %0 = vector.load %arg1[%c0, %c0_0] : memref<32x128xf32, #tpu.memory_space<vmem>>, vector<32x128xf32>
    %c0_1 = arith.constant 0 : index
    %c0_2 = arith.constant 0 : index
    %1 = vector.load %arg2[%c0_1, %c0_2] : memref<128x12xf32, #tpu.memory_space<vmem>>, vector<128x12xf32>
    %cst = arith.constant dense<0.000000e+00> : vector<32x12xf32>
    %2 = tpu.matmul %0, %1, %cst {dimension_numbers = #tpu.dot_dimension_numbers<[1], [0], [0], [1], [0, 0, 1, 1], [], []>} : vector<32x128xf32>, vector<128x12xf32>, vector<32x12xf32> -> vector<32x12xf32>
    %c0_3 = arith.constant 0 : index
    %c0_4 = arith.constant 0 : index
    %3 = vector.load %arg3[%c0_3, %c0_4] : memref<1x12xf32, #tpu.memory_space<vmem>>, vector<1x12xf32>
    %4 = vector.broadcast %3 : vector<1x12xf32> to vector<32x12xf32>
    %5 = arith.addf %2, %4 : vector<32x12xf32>
    %c0_5 = arith.constant 0 : index
    %c0_6 = arith.constant 0 : index
    %6 = vector.load %arg4[%c0_5, %c0_6] : memref<32x12xf32, #tpu.memory_space<vmem>>, vector<32x12xf32>
    %7 = arith.addf %5, %6 : vector<32x12xf32>
    %c0_7 = arith.constant 0 : index
    %c0_8 = arith.constant 0 : index
    %8 = vector.load %arg5[%c0_7, %c0_8] : memref<32x12xf32, #tpu.memory_space<vmem>>, vector<32x12xf32>
    tpu.vector_store %arg5[%c0_7, %c0_8], %7 {strides = array<i32>} : memref<32x12xf32, #tpu.memory_space<vmem>>, vector<32x12xf32>,
    return
  }
  func.func @transform_0(%arg0: i32) -> (i32, i32) {
    %c0_i32 = arith.constant 0 : i32
    %c0_i32_0 = arith.constant 0 : i32
    return %arg0, %c0_i32 : i32, i32
  }
  func.func @transform_1(%arg0: i32) -> (i32, i32) {
    %c0_i32 = arith.constant 0 : i32
    %c0_i32_0 = arith.constant 0 : i32
    %c0_i32_1 = arith.constant 0 : i32
    return %c0_i32, %c0_i32_0 : i32, i32
  }
  func.func @transform_2(%arg0: i32) -> (i32, i32) {
    %c0_i32 = arith.constant 0 : i32
    %c0_i32_0 = arith.constant 0 : i32
    %c0_i32_1 = arith.constant 0 : i32
    return %c0_i32, %c0_i32_0 : i32, i32
  }
  func.func @transform_3(%arg0: i32) -> (i32, i32) {
    %c0_i32 = arith.constant 0 : i32
    %c0_i32_0 = arith.constant 0 : i32
    return %arg0, %c0_i32 : i32, i32
  }
  func.func @transform_4(%arg0: i32) -> (i32, i32) {
    %c0_i32 = arith.constant 0 : i32
    %c0_i32_0 = arith.constant 0 : i32
    return %arg0, %c0_i32 : i32, i32
  }
}

</mosaic_0001>

<llo_original>
// kernel: tile.8
$region0: #{tile.8}
  #allocation0 [shape = 's32[1]{0}', space=sflag, size = 0x4, scoped, tag = 'scoped memory for tile.8']
  %s0 = inlined_call_operand.vmem [shape: f32[3], index: 0, kind: input, shape index: {}]
  %s1 = inlined_call_operand.vmem [shape: f32[4,3], index: 1, kind: output, shape index: {}]
  // Predicated region
  $region2: #{tile.8} parent=0 // pred_check
    _
  $region3: #{tile.8} parent=0 // pred_check_branch
    %3 = sbr.rel (0) target = $region5
  $region4: #{tile.8} parent=0 // pred_region
    _
  $region5: #{tile.8} parent=0 // pred_fallthru
    _
  %v4 = vld [vmem:[%s0] ss:$0 sm:$0xff]
  %5 = vst [vmem:[%s1] sm:$0xf] %v4

// kernel: tile.9
$region0: #{tile.9}
  %s0 = inlined_call_operand.vmem [shape: f32[4,3], index: 0, kind: input, shape index: {}]
  %s1 = inlined_call_operand.vmem [shape: f32[1,12], index: 1, kind: output, shape index: {}]
  $region1: #{tile.9} parent=0
    #allocation0 [shape = 'u8[4096]{0}', space=vmem, size = 0x1000, scoped, tag = 'scoped mem for output reshape']
    #allocation1 [shape = 'u8[4096]{0}', space=vmem, size = 0x1000, scoped, tag = 'scoped mem for input reshape']
    %s3 = sshllo.u32 0, 4
    %v4 = vld [vmem:[%s0] sm:%s3]
    %5 = vst [vmem:[#allocation1] sm:%s3] %v4
    %v6 = vld [vmem:[#allocation1] sm:$0x1]
    %vm7 = vcmask 23552
    %8 = vst.msk [vmem:[#allocation0] sm:$0x1] %vm7, %v6
    %s9 = scalar_lea.vmem [#allocation1], 3
    %v10 = vld [vmem:[%s9] sm:$0x1]
    %11 = vrot.lane.b32.xlu0 %v10, 9
    %v12 = vpop.permute.xlu0 %11
    %vm13 = vcmask 97352
    %14 = vst.msk [vmem:[#allocation0] sm:$0x1] %vm13, %v12
    %s15 = scalar_lea.vmem [#allocation1], 2
    %v16 = vld [vmem:[%s15] sm:$0x1]
    %17 = vrot.lane.b32.xlu0 %v16, 6
    %v18 = vpop.permute.xlu0 %17
    %vm19 = vcmask 72752
    %20 = vst.msk [vmem:[#allocation0] sm:$0x1] %vm19, %v18
    %s21 = scalar_lea.vmem [#allocation1], 1
    %v22 = vld [vmem:[%s21] sm:$0x1]
    %23 = vrot.lane.b32.xlu0 %v22, 3
    %v24 = vpop.permute.xlu0 %23
    %vm25 = vcmask 48152
    %26 = vst.msk [vmem:[#allocation0] sm:$0x1] %vm25, %v24
    %s28 = sshllo.u32 0, 1
    %v30 = vld [vmem:[#allocation0] sm:%s28]
    %s31 = sshllo.u32 0, 1
    %32 = vst [vmem:[%s1] sm:%s31] %v30

// kernel: to_rgb_forward.1
$region0: #{to_rgb_forward.1}
  #allocation0 [shape = 'u32[]', space=smem, size = 0x4, offset = 0x4, fixed_abs, tag = 'smem constant byte address 0x4 - core index']
  #allocation1 [shape = 'u32[144,128]{1,0:T(1,128)}', space=vmem, size = 0x12000, scoped, tag = 'internal scratch']
  %s0 = inlined_call_operand.vmem [shape: f32[32,128], index: 0, kind: input, shape index: {}]
  %s1 = inlined_call_operand.vmem [shape: f32[128,12], index: 1, kind: input, shape index: {}]
  %s2 = inlined_call_operand.vmem [shape: f32[1,12], index: 2, kind: input, shape index: {}]
  %s3 = inlined_call_operand.vmem [shape: f32[32,12], index: 3, kind: input, shape index: {}]
  %s4 = inlined_call_operand.vmem [shape: f32[32,12], index: 4, kind: output, shape index: {}]
  %s5 = sld [smem:[#allocation0]]
  $region26: #{to_rgb_forward.1} parent=0
    _
  %s7 = ssub.s32 1, %s5
  %s8 = scalar_select 0, %s7, %s5
  // Predicated region
  $region2: #{to_rgb_forward.1} parent=0 // pred_check
    _
  $region3: #{to_rgb_forward.1} parent=0 // pred_check_branch
    %10 = sbr.rel (0) target = $region5
  $region4: #{to_rgb_forward.1} parent=0 // pred_region
    _
  $region5: #{to_rgb_forward.1} parent=0 // pred_fallthru
    _
  // Predicated region
  $region6: #{to_rgb_forward.1} parent=0 // pred_check
    _
  $region7: #{to_rgb_forward.1} parent=0 // pred_check_branch
    %12 = sbr.rel (0) target = $region9
  $region8: #{to_rgb_forward.1} parent=0 // pred_region
    _
  $region9: #{to_rgb_forward.1} parent=0 // pred_fallthru
    _
  // Predicated region
  $region10: #{to_rgb_forward.1} parent=0 // pred_check
    _
  $region11: #{to_rgb_forward.1} parent=0 // pred_check_branch
    %14 = sbr.rel (0) target = $region13
  $region12: #{to_rgb_forward.1} parent=0 // pred_region
    _
  $region13: #{to_rgb_forward.1} parent=0 // pred_fallthru
    _
  // Predicated region
  $region14: #{to_rgb_forward.1} parent=0 // pred_check
    _
  $region15: #{to_rgb_forward.1} parent=0 // pred_check_branch
    %16 = sbr.rel (0) target = $region17
  $region16: #{to_rgb_forward.1} parent=0 // pred_region
    _
  $region17: #{to_rgb_forward.1} parent=0 // pred_fallthru
    _
  %v17 = vld [vmem:[%s0] sm:$0xff]
  %v18 = vld [vmem:[%s0 + $0x8] sm:$0xff]
  %v19 = vld [vmem:[%s0 + $0x10] sm:$0xff]
  %v20 = vld [vmem:[%s0 + $0x18] sm:$0xff]
  %v21 = vld [vmem:[%s1] sm:$0xff]
  %v22 = vld [vmem:[%s1 + $0x8] sm:$0xff]
  %v23 = vld [vmem:[%s1 + $0x10] sm:$0xff]
  %v24 = vld [vmem:[%s1 + $0x18] sm:$0xff]
  %v25 = vld [vmem:[%s1 + $0x20] sm:$0xff]
  %v26 = vld [vmem:[%s1 + $0x28] sm:$0xff]
  %v27 = vld [vmem:[%s1 + $0x30] sm:$0xff]
  %v28 = vld [vmem:[%s1 + $0x38] sm:$0xff]
  %v29 = vld [vmem:[%s1 + $0x40] sm:$0xff]
  %v30 = vld [vmem:[%s1 + $0x48] sm:$0xff]
  %v31 = vld [vmem:[%s1 + $0x50] sm:$0xff]
  %v32 = vld [vmem:[%s1 + $0x58] sm:$0xff]
  %v33 = vld [vmem:[%s1 + $0x60] sm:$0xff]
  %v34 = vld [vmem:[%s1 + $0x68] sm:$0xff]
  %v35 = vld [vmem:[%s1 + $0x70] sm:$0xff]
  %v36 = vld [vmem:[%s1 + $0x78] sm:$0xff]
  %v37 = vld [vmem:[%s2] sm:$0x1]
  %v39 = vlaneseq
  %v40 = vshrl.u32 %v39, 7
  %v41 = vsub.s32 0, %v40
  %v42 = vrot.slane %v37, %v41
  %44 = vmatprep.subr.mxu0 0.0
  %45 = vmatpush1.msra.mxu0 %v21
  %46 = vmatprep.subr.mxu0 0.0
  %47 = vmatpush1.msra.mxu0 %v22
  %48 = vmatprep.subr.mxu0 0.0
  %49 = vmatpush1.msra.mxu0 %v23
  %50 = vmatprep.subr.mxu0 0.0
  %51 = vmatpush1.msra.mxu0 %v24
  %52 = vmatprep.subr.mxu0 0.0
  %53 = vmatpush1.msra.mxu0 %v25
  %54 = vmatprep.subr.mxu0 0.0
  %55 = vmatpush1.msra.mxu0 %v26
  %56 = vmatprep.subr.mxu0 0.0
  %57 = vmatpush1.msra.mxu0 %v27
  %58 = vmatprep.subr.mxu0 0.0
  %59 = vmatpush1.msra.mxu0 %v28
  %60 = vmatprep.subr.mxu0 0.0
  %61 = vmatpush1.msra.mxu0 %v29
  %62 = vmatprep.subr.mxu0 0.0
  %63 = vmatpush1.msra.mxu0 %v30
  %64 = vmatprep.subr.mxu0 0.0
  %65 = vmatpush1.msra.mxu0 %v31
  %66 = vmatprep.subr.mxu0 0.0
  %67 = vmatpush1.msra.mxu0 %v32
  %68 = vmatprep.subr.mxu0 0.0
  %69 = vmatpush1.msra.mxu0 %v33
  %70 = vmatprep.subr.mxu0 0.0
  %71 = vmatpush1.msra.mxu0 %v34
  %72 = vmatprep.subr.mxu0 0.0
  %73 = vmatpush1.msra.mxu0 %v35
  %74 = vmatprep.subr.mxu0 0.0
  %75 = vmatpush1.msra.mxu0 %v36
  %76 = vmatprep.subr.mxu0 0.0
  %77 = vmatpush1.msra.mxu0 0.0
  %78 = vmatprep.subr.mxu0 0.0
  %79 = vmatpush1.msra.mxu0 0.0
  %80 = vmatprep.subr.mxu0 0.0
  %81 = vmatpush1.msra.mxu0 0.0
  %82 = vmatprep.subr.mxu0 0.0
  %83 = vmatpush1.msra.mxu0 0.0
  %84 = vmatprep.subr.mxu0 0.0
  %85 = vmatpush1.msra.mxu0 0.0
  %86 = vmatprep.subr.mxu0 0.0
  %87 = vmatpush1.msra.mxu0 0.0
  %88 = vmatprep.subr.mxu0 0.0
  %89 = vmatpush1.msra.mxu0 0.0
  %90 = vmatprep.subr.mxu0 0.0
  %91 = vmatpush1.msra.mxu0 0.0
  %92 = vmatprep.subr.mxu0 0.0
  %93 = vmatpush1.msra.mxu0 0.0
  %94 = vmatprep.subr.mxu0 0.0
  %95 = vmatpush1.msra.mxu0 0.0
  %96 = vmatprep.subr.mxu0 0.0
  %97 = vmatpush1.msra.mxu0 0.0
  %98 = vmatprep.subr.mxu0 0.0
  %99 = vmatpush1.msra.mxu0 0.0
  %100 = vmatprep.subr.mxu0 0.0
  %101 = vmatpush1.msra.mxu0 0.0
  %102 = vmatprep.subr.mxu0 0.0
  %103 = vmatpush1.msra.mxu0 0.0
  %104 = vmatprep.subr.mxu0 0.0
  %105 = vmatpush1.msra.mxu0 0.0
  %106 = vmatprep.subr.mxu0 0.0
  %107 = vmatpush1.msra.mxu0 0.0
  %108 = vmatprep.mubr.f32.mxu0 0.0
  %109 = vmatmul.mubr.f32.gmra.mrb[0].mxu0 %v17
  %v110 = vpop.f32.mrb[0].mxu0
  %v111 = vadd.f32 %v42, %v110
  %v112 = vpop.f32.mrb[0].mxu0
  %113 = vmatprep.mubr.f32.mxu0 0.0
  %114 = vmatmul.mubr.f32.gmra.mrb[0].mxu0 %v18
  %v115 = vpop.f32.mrb[0].mxu0
  %v116 = vadd.f32 %v42, %v115
  %v117 = vpop.f32.mrb[0].mxu0
  %118 = vmatprep.mubr.f32.mxu0 0.0
  %119 = vmatmul.mubr.f32.gmra.mrb[0].mxu0 %v19
  %v120 = vpop.f32.mrb[0].mxu0
  %v121 = vadd.f32 %v42, %v120
  %v122 = vpop.f32.mrb[0].mxu0
  %123 = vmatprep.mubr.f32.mxu0 0.0
  %124 = vmatmul.mubr.f32.gmra.mrb[0].mxu0 %v20
  %v125 = vpop.f32.mrb[0].mxu0
  %v126 = vadd.f32 %v42, %v125
  %v127 = vpop.f32.mrb[0].mxu0
  %128 = vdwg.mxu0
  %v129 = vld [vmem:[%s3] sm:$0xff]
  %v130 = vld [vmem:[%s3 + $0x8] sm:$0xff]
  %v131 = vld [vmem:[%s3 + $0x10] sm:$0xff]
  %v132 = vld [vmem:[%s3 + $0x18] sm:$0xff]
  %v133 = vadd.f32 %v111, %v129
  %v134 = vadd.f32 %v116, %v130
  %v135 = vadd.f32 %v121, %v131
  %v136 = vadd.f32 %v126, %v132
  %vm137 = vcmask 97280
  %138 = vst.msk [vmem:[%s4] sm:$0xff] %vm137, %v133
  %139 = vst.msk [vmem:[%s4 + $0x8] sm:$0xff] %vm137, %v134
  %140 = vst.msk [vmem:[%s4 + $0x10] sm:$0xff] %vm137, %v135
  %141 = vst.msk [vmem:[%s4 + $0x18] sm:$0xff] %vm137, %v136
  // Predicated region
  $region18: #{to_rgb_forward.1} parent=0 // pred_check
    _
  $region19: #{to_rgb_forward.1} parent=0 // pred_check_branch
    %143 = sbr.rel (0) target = $region21
  $region20: #{to_rgb_forward.1} parent=0 // pred_region
    _
  $region21: #{to_rgb_forward.1} parent=0 // pred_fallthru
    _
  // Predicated region
  $region22: #{to_rgb_forward.1} parent=0 // pred_check
    _
  $region23: #{to_rgb_forward.1} parent=0 // pred_check_branch
    %145 = sbr.rel (0) target = $region25
  $region24: #{to_rgb_forward.1} parent=0 // pred_region
    _
  $region25: #{to_rgb_forward.1} parent=0 // pred_fallthru
    _

</llo_original>
